<compile_context>
chip_gen: v5e
topology: v5e:2x2
jax: 0.10.0
libtpu: 0.0.40
codegen_flags: <defaults>
</compile_context>

<pallas_src>
import jax
import jax.numpy as jnp
from jax import lax
from jax.experimental import pallas as pl
from jax.experimental.pallas import tpu as pltpu


def _chn_attn_kernel(x_ref, w_ref, b_ref, o_ref):
    # x_ref : (TB, C, HWp)        batch tile, flattened (+ lane-padded) spatial
    # w_ref : (out_chn, C)        1x1 conv weight
    # b_ref : (out_chn, 1)        1x1 conv bias (column-shaped; no transpose needed)
    # o_ref : (TB, out_chn, HWp)
    x = x_ref[...]                                   # native dtype -> MXU operands
    tb = x.shape[0]

    # Per-batch Gram matrix: logits[b] = x[b] @ x[b]^T  -> (TB, C, C), f32 accumulate.
    logits = lax.dot_general(
        x, x,
        dimension_numbers=(((2,), (2,)), ((0,), (0,))),
        preferred_element_type=jnp.float32,
    )

    # Row softmax in f32 (max/sum on XLU, exp on EUP, reciprocal on EUP -> cheap slots).
    m = jnp.max(logits, axis=-1, keepdims=True)
    p = jnp.exp(logits - m)
    weights = p * pl.reciprocal(jnp.sum(p, axis=-1, keepdims=True), approx=True)

    # Fold the 1x1 conv into the attention weights:
    #   fused[b] = W @ weights[b]          -> (TB, out_chn, C)   (tiny matmul, f32)
    #   out[b]   = fused[b] @ x[b]         -> (TB, out_chn, HWp) (single big MXU matmul)
    w = w_ref[...].astype(jnp.float32)
    wb = jnp.broadcast_to(w[None, :, :], (tb,) + w.shape)   # once per grid step, tiny
    fused = lax.dot_general(
        wb, weights,
        dimension_numbers=(((2,), (1,)), ((0,), (0,))),
        preferred_element_type=jnp.float32,
    )

    out = lax.dot_general(
        fused.astype(x.dtype), x,
        dimension_numbers=(((2,), (1,)), ((0,), (0,))),
        preferred_element_type=jnp.float32,
    )
    out = out + b_ref[...].astype(jnp.float32)[None, :, :]   # (1, out_chn, 1) broadcast add
    o_ref[...] = out.astype(o_ref.dtype)


def _pick_batch_tile(n, per_batch_bytes, budget_bytes=4 << 20):
    """Largest divisor of n whose per-step block fits the budget.
    Prefers >= 2 grid steps (double-buffer overlap / multi-TC split) when possible."""
    cap = max(1, budget_bytes // max(per_batch_bytes, 1))
    divisors = [d for d in range(1, n + 1) if n % d == 0 and d <= cap] or [1]
    multi = [d for d in divisors if n // d >= 2]
    return max(multi) if multi else max(divisors)


def s_chn_attention_2d(x, conv_w, conv_b):
    """x: (N, C, H, W); conv_w: (out_chn, C); conv_b: (out_chn,).
    Returns (N, out_chn, H, W) == Conv1x1(softmax(x_HW x_HW^T) @ x_HW)."""
    N, C, H, W = x.shape
    out_chn = conv_w.shape[0]
    HW = H * W
    HWp = max(128, ((HW + 127) // 128) * 128)        # lane-aligned last dim

    x_flat = x.reshape(N, C, HW)
    if HWp != HW:
        # Zero padding: padded lanes add 0 to the Gram logits and are sliced off below.
        x_flat = jnp.pad(x_flat, ((0, 0), (0, 0), (0, HWp - HW)))

    itemsize = jnp.dtype(x.dtype).itemsize
    per_batch_bytes = (C + out_chn) * HWp * itemsize      # input + output slab per batch elem
    TB = _pick_batch_tile(N, per_batch_bytes)             # double-buffered blocks stay << scoped VMEM
    grid = (N // TB,)
    # TODO(synk): very large C*HW (single batch element > a few MiB) would want an HW-tiled
    # two-pass (Gram reduction then apply) variant; not needed at these shapes.

    b_col = conv_b.reshape(out_chn, 1)

    out_flat = pl.pallas_call(
        _chn_attn_kernel,
        out_shape=jax.ShapeDtypeStruct((N, out_chn, HWp), x.dtype),
        grid_spec=pltpu.PrefetchScalarGridSpec(
            num_scalar_prefetch=0,
            grid=grid,
            in_specs=[
                pl.BlockSpec((TB, C, HWp), lambda n: (n, 0, 0)),
                pl.BlockSpec((out_chn, C), lambda n: (0, 0)),
                pl.BlockSpec((out_chn, 1), lambda n: (0, 0)),
            ],
            out_specs=pl.BlockSpec((TB, out_chn, HWp), lambda n: (n, 0, 0)),
        ),
        compiler_params=pltpu.CompilerParams(
            dimension_semantics=("parallel",),
        ),
    )(x_flat, conv_w, b_col)

    if HWp != HW:
        out_flat = out_flat[:, :, :HW]
    return out_flat.reshape(N, out_chn, H, W)


def _reference(x, conv_w, conv_b):
    """Pure-JAX reference reproducing the PyTorch forward."""
    N, C, H, W = x.shape
    x_hw = x.reshape(N, C, H * W)
    logits = jnp.einsum('ncl,nkl->nck', x_hw, x_hw)
    weights = jax.nn.softmax(logits, axis=-1)
    attn = jnp.einsum('nck,nkl->ncl', weights, x_hw)
    out = jnp.einsum('oc,ncl->nol', conv_w, attn) + conv_b[None, :, None]
    return out.reshape(N, conv_w.shape[0], H, W)


if __name__ == "__main__":
    key = jax.random.PRNGKey(0)
    k_x, k_w, k_b = jax.random.split(key, 3)

    N, in_chn, H, W = 2, 4, 16, 16
    out_chn = 8

    x = jax.random.normal(k_x, (N, in_chn, H, W), dtype=jnp.float32)

    # 1x1 conv <-> dense over channels; PyTorch-style uniform(-1/sqrt(fan_in), 1/sqrt(fan_in)).
    bound = 1.0 / (in_chn ** 0.5)
    conv_w = jax.random.uniform(k_w, (out_chn, in_chn), jnp.float32, -bound, bound)
    conv_b = jax.random.uniform(k_b, (out_chn,), jnp.float32, -bound, bound)

    out = s_chn_attention_2d(x, conv_w, conv_b)
    out = jax.block_until_ready(out)

    ref = _reference(x, conv_w, conv_b)
    assert out.shape == (N, out_chn, H, W)
    # Tolerance accounts for the conv/attention reassociation and the EUP approx reciprocal.
    assert jnp.allclose(out, ref, atol=2e-3, rtol=2e-3), "mismatch vs reference"

    print("KERNEL_OK")
</pallas_src>

<mosaic_0001>
module attributes {stable_mosaic.version = 11 : i64} {
  func.func @_chn_attn_kernel(%arg0: i32, %arg1: memref<1x4x256xf32, #tpu.memory_space<vmem>>, %arg2: memref<8x4xf32, #tpu.memory_space<vmem>>, %arg3: memref<8x1xf32, #tpu.memory_space<vmem>>, %arg4: memref<1x8x256xf32, #tpu.memory_space<vmem>>) attributes {dimension_semantics = [#tpu.dimension_semantics<parallel>], iteration_bounds = array<i64: 2>, scalar_prefetch = 0 : i64, scratch_operands = 0 : i64, tpu.core_type = #tpu.core_type<tc>, window_params = [{transform_indices = @transform_0, window_bounds = array<i64: 1, 4, 256>}, {pipeline_mode = #tpu.pipeline_mode<synchronous>, transform_indices = @transform_1, window_bounds = array<i64: 8, 4>}, {pipeline_mode = #tpu.pipeline_mode<synchronous>, transform_indices = @transform_2, window_bounds = array<i64: 8, 1>}, {transform_indices = @transform_3, window_bounds = array<i64: 1, 8, 256>}]} {
    %c0 = arith.constant 0 : index
    %c0_0 = arith.constant 0 : index
    %c0_1 = arith.constant 0 : index
    %0 = vector.load %arg1[%c0, %c0_0, %c0_1] : memref<1x4x256xf32, #tpu.memory_space<vmem>>, vector<1x4x256xf32>
    %cst = arith.constant dense<0.000000e+00> : vector<1x4x4xf32>
    %1 = tpu.matmul %0, %0, %cst {dimension_numbers = #tpu.dot_dimension_numbers<[2], [2], [1], [1], [0, 0, 0, 1, 1, 1], [0], [0]>} : vector<1x4x256xf32>, vector<1x4x256xf32>, vector<1x4x4xf32> -> vector<1x4x4xf32>
    %cst_2 = arith.constant dense<0xFF800000> : vector<1x4xf32>
    %2 = vector.multi_reduction <maximumf>, %1, %cst_2 [2] : vector<1x4x4xf32> to vector<1x4xf32>
    %3 = vector.shape_cast %2 : vector<1x4xf32> to vector<1x4x1xf32>
    %4 = vector.broadcast %3 : vector<1x4x1xf32> to vector<1x4x4xf32>
    %5 = arith.subf %1, %4 : vector<1x4x4xf32>
    %6 = math.exp %5 : vector<1x4x4xf32>
    %cst_3 = arith.constant dense<0.000000e+00> : vector<1x4xf32>
    %7 = vector.multi_reduction <add>, %6, %cst_3 [2] : vector<1x4x4xf32> to vector<1x4xf32>
    %8 = vector.shape_cast %7 : vector<1x4xf32> to vector<1x4x1xf32>
    %9 = tpu.reciprocal %8 {approx = true} : vector<1x4x1xf32> -> vector<1x4x1xf32>
    %10 = vector.broadcast %9 : vector<1x4x1xf32> to vector<1x4x4xf32>
    %11 = arith.mulf %6, %10 : vector<1x4x4xf32>
    %c0_4 = arith.constant 0 : index
    %c0_5 = arith.constant 0 : index
    %12 = vector.load %arg2[%c0_4, %c0_5] : memref<8x4xf32, #tpu.memory_space<vmem>>, vector<8x4xf32>
    %13 = vector.shape_cast %12 : vector<8x4xf32> to vector<1x8x4xf32>
    %cst_6 = arith.constant dense<0.000000e+00> : vector<1x8x4xf32>
    %14 = tpu.matmul %13, %11, %cst_6 {dimension_numbers = #tpu.dot_dimension_numbers<[2], [1], [1], [2], [0, 0, 0, 1, 1, 2], [0], [0]>} : vector<1x8x4xf32>, vector<1x4x4xf32>, vector<1x8x4xf32> -> vector<1x8x4xf32>
    %cst_7 = arith.constant dense<0.000000e+00> : vector<1x8x256xf32>
    %15 = tpu.matmul %14, %0, %cst_7 {dimension_numbers = #tpu.dot_dimension_numbers<[2], [1], [1], [2], [0, 0, 0, 1, 1, 2], [0], [0]>} : vector<1x8x4xf32>, vector<1x4x256xf32>, vector<1x8x256xf32> -> vector<1x8x256xf32>
    %c0_8 = arith.constant 0 : index
    %c0_9 = arith.constant 0 : index
    %16 = vector.load %arg3[%c0_8, %c0_9] : memref<8x1xf32, #tpu.memory_space<vmem>>, vector<8x1xf32>
    %17 = vector.shape_cast %16 : vector<8x1xf32> to vector<1x8x1xf32>
    %18 = vector.broadcast %17 : vector<1x8x1xf32> to vector<1x8x256xf32>
    %19 = arith.addf %15, %18 : vector<1x8x256xf32>
    %c0_10 = arith.constant 0 : index
    %c0_11 = arith.constant 0 : index
    %c0_12 = arith.constant 0 : index
    %20 = vector.load %arg4[%c0_10, %c0_11, %c0_12] : memref<1x8x256xf32, #tpu.memory_space<vmem>>, vector<1x8x256xf32>
    tpu.vector_store %arg4[%c0_10, %c0_11, %c0_12], %19 {strides = array<i32>} : memref<1x8x256xf32, #tpu.memory_space<vmem>>, vector<1x8x256xf32>,
    return
  }
  func.func @transform_0(%arg0: i32) -> (i32, i32, i32) {
    %c0_i32 = arith.constant 0 : i32
    %c0_i32_0 = arith.constant 0 : i32
    %c0_i32_1 = arith.constant 0 : i32
    return %arg0, %c0_i32, %c0_i32_0 : i32, i32, i32
  }
  func.func @transform_1(%arg0: i32) -> (i32, i32) {
    %c0_i32 = arith.constant 0 : i32
    %c0_i32_0 = arith.constant 0 : i32
    %c0_i32_1 = arith.constant 0 : i32
    return %c0_i32, %c0_i32_0 : i32, i32
  }
  func.func @transform_2(%arg0: i32) -> (i32, i32) {
    %c0_i32 = arith.constant 0 : i32
    %c0_i32_0 = arith.constant 0 : i32
    %c0_i32_1 = arith.constant 0 : i32
    return %c0_i32, %c0_i32_0 : i32, i32
  }
  func.func @transform_3(%arg0: i32) -> (i32, i32, i32) {
    %c0_i32 = arith.constant 0 : i32
    %c0_i32_0 = arith.constant 0 : i32
    %c0_i32_1 = arith.constant 0 : i32
    return %arg0, %c0_i32, %c0_i32_0 : i32, i32, i32
  }
}

</mosaic_0001>

<llo_original>
// kernel: tpu_custom_call.1
$region0: #{tpu_custom_call.1}
  #allocation0 [shape = 'u32[]', space=smem, size = 0x4, offset = 0x4, fixed_abs, tag = 'smem constant byte address 0x4 - core index']
  #allocation1 [shape = 'u32[72,128]{1,0:T(1,128)}', space=vmem, size = 0x9000, scoped, tag = 'internal scratch']
  %s0 = inlined_call_operand.vmem [shape: f32[2,4,256], index: 0, kind: input, shape index: {}]
  %s1 = inlined_call_operand.vmem [shape: f32[8,4], index: 1, kind: input, shape index: {}]
  %s2 = inlined_call_operand.vmem [shape: f32[8,1], index: 2, kind: input, shape index: {}]
  %s3 = inlined_call_operand.hbm [shape: f32[2,8,256], index: 3, kind: output, shape index: {}]
  %s4 = sld [smem:[#allocation0]]
  $region45: #{tpu_custom_call.1} parent=0
    _
  %s6 = ssub.s32 1, %s4
  %s7 = scalar_select 0, %s6, %s4
  $region1: #{tpu_custom_call.1} parent=0
    #allocation2 [shape = 'u8[16384]{0}', space=vmem, size = 0x4000, scoped, tag = 'output window, operand 0']
    #allocation3 [shape = 's32[2]{0}', space=sflag, size = 0x8, scoped, tag = 'scoped memory for tpu_custom_call.1']
    %8 = vsyncpa [#allocation3], 0
    %s9 = scalar_lea.sflag [#allocation3], 1
    %10 = vsyncpa %s9, 0
    loop: start=0, step=1, limit=4
    $region2: #{tpu_custom_call.1} parent=1 // loop_pre_header
      _
    $region3: #{tpu_custom_call.1} parent=1 // loop_header
      %s12 = sphi 0, %s16
      %p13 = scmp.ge.s32.totalorder %s12, 4
      %s22 = sphi 0, %s24
      %s25 = sphi 0, %s22
      %s26 = sphi 0, %s25
      %s42 = sphi 0, %s26
      %s46 = sphi 0, %s46
      %s48 = sphi 0, %s46
      %s49 = sphi 0, %s48
      %s63 = sphi 0, %s49
      %s67 = sphi 0, %s67
      %s69 = sphi 0, %s67
      %s70 = sphi 0, %s69
      %s84 = sphi 0, %s70
      %s90 = sphi 0, %s92
      %s93 = sphi 0, %s90
      %s94 = sphi 0, %s93
      %s110 = sphi 0, %s94
    $region4: #{tpu_custom_call.1} parent=1 // loop_header_branch
      %15 = sbr.rel (%p13) target = $region8
    $region5: #{tpu_custom_call.1} parent=1 // loop_body
      %s17 = ssub.s32 %s12, 1
      %s18 = ssub.s32 %s12, 2
      %s19 = sadd.s32 %s12, 1
      %s20 = ssub.s32 %s12, %s19
      %p21 = scmp.eq.s32.totalorder %s20, 0
      %s23 = sadd.s32 %s22, 1
      %s24 = scalar_select %p21, %s22, %s23
      %p27 = pneg %p21
      %p28 = scmp.eq.s32.totalorder %s12, 1
      %p29 = por %p27, %p28
      %p30 = scmp.ne.s32.totalorder %s22, %s25
      %p31 = scmp.eq.s32.totalorder %s12, 0
      %p32 = por %p30, %p31
      %p33 = scmp.ne.s32.totalorder %s22, %s25
      %p34 = scmp.eq.s32.totalorder %s17, 1
      %p35 = por %p33, %p34
      %p36 = scmp.ne.s32.totalorder %s25, %s26
      %p37 = scmp.eq.s32.totalorder %s17, 0
      %p38 = por %p36, %p37
      %p39 = scmp.ne.s32.totalorder %s25, %s26
      %p40 = scmp.eq.s32.totalorder %s18, 1
      %p41 = por %p39, %p40
      %p43 = scmp.ne.s32.totalorder %s26, %s42
      %p44 = scmp.eq.s32.totalorder %s18, 0
      %p45 = por %p43, %p44
      %s47 = sadd.s32 %s46, 1
      %p50 = scmp.eq.s32.totalorder %s12, 1
      %p51 = scmp.ne.s32.totalorder %s46, %s48
      %p52 = scmp.eq.s32.totalorder %s12, 0
      %p53 = por %p51, %p52
      %p54 = scmp.ne.s32.totalorder %s46, %s48
      %p55 = scmp.eq.s32.totalorder %s17, 1
      %p56 = por %p54, %p55
      %p57 = scmp.ne.s32.totalorder %s48, %s49
      %p58 = scmp.eq.s32.totalorder %s17, 0
      %p59 = por %p57, %p58
      %p60 = scmp.ne.s32.totalorder %s48, %s49
      %p61 = scmp.eq.s32.totalorder %s18, 1
      %p62 = por %p60, %p61
      %p64 = scmp.ne.s32.totalorder %s49, %s63
      %p65 = scmp.eq.s32.totalorder %s18, 0
      %p66 = por %p64, %p65
      %s68 = sadd.s32 %s67, 1
      %p71 = scmp.eq.s32.totalorder %s12, 1
      %p72 = scmp.ne.s32.totalorder %s67, %s69
      %p73 = scmp.eq.s32.totalorder %s12, 0
      %p74 = por %p72, %p73
      %p75 = scmp.ne.s32.totalorder %s67, %s69
      %p76 = scmp.eq.s32.totalorder %s17, 1
      %p77 = por %p75, %p76
      %p78 = scmp.ne.s32.totalorder %s69, %s70
      %p79 = scmp.eq.s32.totalorder %s17, 0
      %p80 = por %p78, %p79
      %p81 = scmp.ne.s32.totalorder %s69, %s70
      %p82 = scmp.eq.s32.totalorder %s18, 1
      %p83 = por %p81, %p82
      %p85 = scmp.ne.s32.totalorder %s70, %s84
      %p86 = scmp.eq.s32.totalorder %s18, 0
      %p87 = por %p85, %p86
      %s88 = ssub.s32 %s12, %s19
      %p89 = scmp.eq.s32.totalorder %s88, 0
      %s91 = sadd.s32 %s90, 1
      %s92 = scalar_select %p89, %s90, %s91
      %p95 = pneg %p89
      %p96 = scmp.eq.s32.totalorder %s12, 1
      %p97 = por %p95, %p96
      %p98 = scmp.ne.s32.totalorder %s90, %s93
      %p99 = scmp.eq.s32.totalorder %s12, 0
      %p100 = por %p98, %p99
      %p101 = scmp.ne.s32.totalorder %s90, %s93
      %p102 = scmp.eq.s32.totalorder %s17, 1
      %p103 = por %p101, %p102
      %p104 = scmp.ne.s32.totalorder %s93, %s94
      %p105 = scmp.eq.s32.totalorder %s17, 0
      %p106 = por %p104, %p105
      %p107 = scmp.ne.s32.totalorder %s93, %s94
      %p108 = scmp.eq.s32.totalorder %s18, 1
      %p109 = por %p107, %p108
      %p111 = scmp.ne.s32.totalorder %s94, %s110
      %p112 = scmp.eq.s32.totalorder %s18, 0
      %p113 = por %p111, %p112
      %p114 = scmp.le.s32.totalorder 1, %s12
      %p115 = scmp.lt.s32.totalorder %s12, 3
      %p116 = pnand %p114, %p115
      %p117 = pneg %p116
      // Predicated region
      $region9: #{tpu_custom_call.1} parent=5 // pred_check
        _
      $region10: #{tpu_custom_call.1} parent=5 // pred_check_branch
        %119 = sbr.rel (%p116) target = $region12
      $region11: #{tpu_custom_call.1} parent=5 // pred_region
        %s120 = ssub.s32 %s12, 1
        // Predicated region
        $region13: #{tpu_custom_call.1} parent=11 // pred_check
          %p121 = pneg %p59
        $region14: #{tpu_custom_call.1} parent=11 // pred_check_branch
          %123 = sbr.rel (%p121) target = $region16
        $region15: #{tpu_custom_call.1} parent=11 // pred_region
          _
        $region16: #{tpu_custom_call.1} parent=11 // pred_fallthru
          _
        // Predicated region
        $region17: #{tpu_custom_call.1} parent=11 // pred_check
          %p124 = pneg %p80
        $region18: #{tpu_custom_call.1} parent=11 // pred_check_branch
          %126 = sbr.rel (%p124) target = $region20
        $region19: #{tpu_custom_call.1} parent=11 // pred_region
          _
        $region20: #{tpu_custom_call.1} parent=11 // pred_fallthru
          _
      $region12: #{tpu_custom_call.1} parent=5 // pred_fallthru
        _
      %p127 = scmp.lt.s32.totalorder %s12, 2
      // Predicated region
      $region21: #{tpu_custom_call.1} parent=5 // pred_check
        %p128 = pneg %p127
      $region22: #{tpu_custom_call.1} parent=5 // pred_check_branch
        %130 = sbr.rel (%p128) target = $region24
      $region23: #{tpu_custom_call.1} parent=5 // pred_region
        // Predicated region
        $region25: #{tpu_custom_call.1} parent=23 // pred_check
          %p131 = pneg %p32
        $region26: #{tpu_custom_call.1} parent=23 // pred_check_branch
          %133 = sbr.rel (%p131) target = $region28
        $region27: #{tpu_custom_call.1} parent=23 // pred_region
          %p134 = scmp.lt.s32.totalorder %s12, 1
          %s135 = scalar_select %p134, %s12, 1
          %s136 = smul.addr %s135, 2
          %s137 = smul.addr %s136, 4
          %s138 = scalar_lea.vmem %s0, %s137
        $region28: #{tpu_custom_call.1} parent=23 // pred_fallthru
          _
      $region24: #{tpu_custom_call.1} parent=5 // pred_fallthru
        _
      %p139 = scmp.le.s32.totalorder 1, %s12
      %p140 = scmp.lt.s32.totalorder %s12, 3
      %p141 = pnand %p139, %p140
      %p142 = pneg %p141
      // Predicated region
      $region29: #{tpu_custom_call.1} parent=5 // pred_check
        _
      $region30: #{tpu_custom_call.1} parent=5 // pred_check_branch
        %144 = sbr.rel (%p141) target = $region32
      $region31: #{tpu_custom_call.1} parent=5 // pred_region
        %s145 = ssub.s32 %s12, 1
        %p146 = scmp.lt.s32.totalorder %s17, 1
        %s147 = scalar_select %p146, %s17, 1
        %s148 = smul.addr %s147, 2
        %s149 = smul.addr %s148, 4
        %s150 = scalar_lea.vmem %s0, %s149
        %p151 = pneg %p38
        %p152 = pneg %p35
        %p153 = pneg %p59
        %p154 = pneg %p56
        %p155 = pneg %p80
        %p156 = pneg %p77
        %p157 = pneg %p106
        %p158 = pneg %p103
        %s159 = sand.u32 %s93, 1
        %s160 = scalar_lea.sflag [#allocation3], %s159
        %s161 = sand.u32 %s93, 1
        %s162 = smul.addr %s161, 16
        %s163 = scalar_lea.vmem [#allocation2], %s162
        %p164 = scmp.lt.s32.totalorder %s17, 1
        %s165 = scalar_select %p164, %s17, 1
        %s166 = smul.addr %s165, 2
        %s167 = smul.addr %s166, 4
        %s168 = scalar_lea.vmem %s0, %s167
        %v169 = vld [vmem:[%s168] sm:$0xff]
        %171 = vst [vmem:[#allocation1] ss:$2 sm:$0xff] %v169
        %v172 = vld.sshfl [vmem:[#allocation1] sm:$0xff pattern:$0x75316420]
        %v173 = vld.sshfl [vmem:[#allocation1 + $0x8] sm:$0xff pattern:$0x75316420]
        %176 = vst [vmem:[#allocation1] ss:$2 sm:$0xff] %v169
        %v177 = vld.sshfl [vmem:[#allocation1] sm:$0xff pattern:$0x75316420]
        %v178 = vld.sshfl [vmem:[#allocation1 + $0x8] sm:$0xff pattern:$0x75316420]
        %181 = vmatpush.xpose.msra.mxu0 0.0
        %182 = vmatpush.xpose.msra.mxu0 0.0
        %183 = vmatpush.xpose.msra.mxu0 0.0
        %184 = vmatpush.xpose.msra.mxu0 0.0
        %185 = vmatpush.xpose.msra.mxu0 0.0
        %186 = vmatpush.xpose.msra.mxu0 0.0
        %187 = vmatpush.xpose.msra.mxu0 0.0
        %188 = vmatpush.xpose.msra.mxu0 0.0
        %189 = vmatpush.xpose.msra.mxu0 0.0
        %190 = vmatpush.xpose.msra.mxu0 0.0
        %191 = vmatpush.xpose.msra.mxu0 0.0
        %192 = vmatpush.xpose.msra.mxu0 0.0
        %193 = vmatpush.xpose.msra.mxu0 0.0
        %194 = vmatpush.xpose.msra.mxu0 0.0
        %195 = vmatpush.xpose.msra.mxu0 0.0
        %196 = vmatpush.xpose.msra.mxu0 %v177
        %197 = vmatmul.f32.gmra.mxu0 %v172
        %v198 = vpop.f32.mrf.mxu0
        %v199 = vadd.f32 0.0, %v198
        %200 = vdwg.mxu0
        %201 = vmatpush.xpose.msra.mxu0 0.0
        %202 = vmatpush.xpose.msra.mxu0 0.0
        %203 = vmatpush.xpose.msra.mxu0 0.0
        %204 = vmatpush.xpose.msra.mxu0 0.0
        %205 = vmatpush.xpose.msra.mxu0 0.0
        %206 = vmatpush.xpose.msra.mxu0 0.0
        %207 = vmatpush.xpose.msra.mxu0 0.0
        %208 = vmatpush.xpose.msra.mxu0 0.0
        %209 = vmatpush.xpose.msra.mxu0 0.0
        %210 = vmatpush.xpose.msra.mxu0 0.0
        %211 = vmatpush.xpose.msra.mxu0 0.0
        %212 = vmatpush.xpose.msra.mxu0 0.0
        %213 = vmatpush.xpose.msra.mxu0 0.0
        %214 = vmatpush.xpose.msra.mxu0 0.0
        %215 = vmatpush.xpose.msra.mxu0 0.0
        %216 = vmatpush.xpose.msra.mxu0 %v178
        %217 = vmatmul.f32.gmra.mxu0 %v173
        %v218 = vpop.f32.mrf.mxu0
        %v219 = vadd.f32 %v199, %v218
        %220 = vdwg.mxu0
        %vm221 = vcmask 27648
        %v222 = vsel %vm221, %v219, -inf
        %223 = vmax.xlane.f32.xlu0 %v222
        %v224 = vpop.xlane.xlu0 %223
        %v225 = vsub.f32 %v219, %v224
        %v226 = vmul.f32 %v225, 1.442695
        %v227 = vpow.pop %v226
        %v228 = vsel %vm221, %v227, 0.0
        %229 = vadd.xlane.f32.xlu0 %v228
        %v230 = vpop.xlane.xlu0 %229
        %v231 = vrcp.pop %v230
        %v232 = vmul.f32 %v227, %v231
        %v233 = vld [vmem:[%s1] sm:$0xff]
        %vm234 = vcmask 31744
        %v236 = vsel %vm234, %v233, 0
        %vm238 = vcmask 1043456
        %v240 = vsel %vm238, %v232, 0
        %242 = vmatpush.msra.mxu0 0.0
        %243 = vmatpush.msra.mxu0 0.0
        %244 = vmatpush.msra.mxu0 0.0
        %245 = vmatpush.msra.mxu0 0.0
        %246 = vmatpush.msra.mxu0 0.0
        %247 = vmatpush.msra.mxu0 0.0
        %248 = vmatpush.msra.mxu0 0.0
        %249 = vmatpush.msra.mxu0 0.0
        %250 = vmatpush.msra.mxu0 0.0
        %251 = vmatpush.msra.mxu0 0.0
        %252 = vmatpush.msra.mxu0 0.0
        %253 = vmatpush.msra.mxu0 0.0
        %254 = vmatpush.msra.mxu0 0.0
        %255 = vmatpush.msra.mxu0 0.0
        %256 = vmatpush.msra.mxu0 0.0
        %257 = vmatpush.msra.mxu0 %v240
        %258 = vmatmul.f32.gmra.mxu0 %v236
        %v259 = vpop.f32.mrf.mxu0
        %v260 = vadd.f32 0.0, %v259
        %261 = vdwg.mxu0
        %v262 = vld [vmem:[%s2] sm:$0xff]
        %264 = vset.pattern.permute.xlu0 0
        %265 = vperm.xlu0 %264, %v262
        %v266 = vpop.permute.xlu0 %265
        %268 = vst [vmem:[#allocation1] ss:$2 sm:$0xff] %v169
        %v269 = vld.sshfl [vmem:[#allocation1] sm:$0xff pattern:$0x75316420]
        %v270 = vld.sshfl [vmem:[#allocation1 + $0x8] sm:$0xff pattern:$0x75316420]
        %v272 = vsel %vm234, %v260, 0
        %v274 = vsel %vm238, %v269, 0
        %v276 = vsel %vm238, %v270, 0
        %278 = vmatpush.msra.mxu0 0.0
        %279 = vmatpush.msra.mxu0 0.0
        %280 = vmatpush.msra.mxu0 0.0
        %281 = vmatpush.msra.mxu0 0.0
        %282 = vmatpush.msra.mxu0 0.0
        %283 = vmatpush.msra.mxu0 0.0
        %284 = vmatpush.msra.mxu0 0.0
        %285 = vmatpush.msra.mxu0 0.0
        %286 = vmatpush.msra.mxu0 0.0
        %287 = vmatpush.msra.mxu0 0.0
        %288 = vmatpush.msra.mxu0 0.0
        %289 = vmatpush.msra.mxu0 0.0
        %290 = vmatpush.msra.mxu0 0.0
        %291 = vmatpush.msra.mxu0 0.0
        %292 = vmatpush.msra.mxu0 0.0
        %293 = vmatpush.msra.mxu0 %v274
        %294 = vmatmul.f32.gmra.mxu0 %v272
        %v295 = vpop.f32.mrf.mxu0
        %v296 = vadd.f32 %v266, %v295
        %297 = vdwg.mxu0
        %298 = vmatpush.msra.mxu0 0.0
        %299 = vmatpush.msra.mxu0 0.0
        %300 = vmatpush.msra.mxu0 0.0
        %301 = vmatpush.msra.mxu0 0.0
        %302 = vmatpush.msra.mxu0 0.0
        %303 = vmatpush.msra.mxu0 0.0
        %304 = vmatpush.msra.mxu0 0.0
        %305 = vmatpush.msra.mxu0 0.0
        %306 = vmatpush.msra.mxu0 0.0
        %307 = vmatpush.msra.mxu0 0.0
        %308 = vmatpush.msra.mxu0 0.0
        %309 = vmatpush.msra.mxu0 0.0
        %310 = vmatpush.msra.mxu0 0.0
        %311 = vmatpush.msra.mxu0 0.0
        %312 = vmatpush.msra.mxu0 0.0
        %313 = vmatpush.msra.mxu0 %v276
        %314 = vmatmul.f32.gmra.mxu0 %v272
        %v315 = vpop.f32.mrf.mxu0
        %v316 = vadd.f32 %v266, %v315
        %317 = vdwg.mxu0
        %318 = vst [vmem:[%s163] sm:$0xff] %v296
        %319 = vst [vmem:[%s163 + $0x8] sm:$0xff] %v316
        %s320 = sand.u32 %s93, 1
        %s321 = scalar_lea.sflag [#allocation3], %s320
        %s322 = sand.u32 %s93, 1
        %s323 = smul.addr %s322, 16
        %s324 = scalar_lea.vmem [#allocation2], %s323
        // Predicated region
        $region33: #{tpu_custom_call.1} parent=31 // pred_check
          %p325 = pneg %p103
        $region34: #{tpu_custom_call.1} parent=31 // pred_check_branch
          %327 = sbr.rel (%p325) target = $region36
        $region35: #{tpu_custom_call.1} parent=31 // pred_region
          %329 = vsyncadd %s321, 0
          %s330 = smul.addr %s17, 2
          %s331 = smul.addr %s330, 8
          %s332 = scalar_lea.hbm %s3, %s331
          %s334 = sshll.u32 %s324, 4
          %s335 = int_to_ptr.vmem [resolvable:$true] %s334
          %s336 = sshll.u32 %s332, 4
          %s337 = int_to_ptr.hbm [resolvable:$true] %s336
          %339 = dma.vmem_to_hbm [thread:$0]  %s335, 256, %s337, %s321
        $region36: #{tpu_custom_call.1} parent=31 // pred_fallthru
          _
      $region32: #{tpu_custom_call.1} parent=5 // pred_fallthru
        _
      %p340 = scmp.le.s32.totalorder 2, %s12
      // Predicated region
      $region37: #{tpu_custom_call.1} parent=5 // pred_check
        %p341 = pneg %p340
      $region38: #{tpu_custom_call.1} parent=5 // pred_check_branch
        %343 = sbr.rel (%p341) target = $region40
      $region39: #{tpu_custom_call.1} parent=5 // pred_region
        %s344 = ssub.s32 %s12, 2
        // Predicated region
        $region41: #{tpu_custom_call.1} parent=39 // pred_check
          %p345 = pneg %p109
        $region42: #{tpu_custom_call.1} parent=39 // pred_check_branch
          %347 = sbr.rel (%p345) target = $region44
        $region43: #{tpu_custom_call.1} parent=39 // pred_region
          %s348 = sand.u32 %s94, 1
          %s349 = scalar_lea.sflag [#allocation3], %s348
          %s350 = sand.u32 %s94, 1
          %s351 = smul.addr %s350, 16
          %s352 = scalar_lea.vmem [#allocation2], %s351
          %354 = dma.done %s349, 256
        $region44: #{tpu_custom_call.1} parent=39 // pred_fallthru
          _
      $region40: #{tpu_custom_call.1} parent=5 // pred_fallthru
        _
    $region6: #{tpu_custom_call.1} parent=1 // loop_footer
      %s16 = sadd.s32 1, %s12
    $region7: #{tpu_custom_call.1} parent=1 // loop_footer_branch
      %11 = sbr.rel target = $region3
    $region8: #{tpu_custom_call.1} parent=1 // loop_exit
      _
    %355 = vsyncpa [#allocation3], 1
    %s356 = scalar_lea.sflag [#allocation3], 1
    %357 = vsyncpa %s356, 1

</llo_original>
